<compile_context>
chip_gen: v7x
topology: tpu7x:2x2x1
jax: 0.10.0
libtpu: 0.0.40
codegen_flags: <defaults>
</compile_context>

<pallas_src>
import functools

import jax
import jax.numpy as jnp
from jax.experimental import pallas as pl
from jax.experimental.pallas import tpu as pltpu


def _cnn_kernel(x_ref, w_ref, b1_ref, w2_ref, b2_ref, out_ref, *,
                apply_sigmoid, compute_dtype):
    """Fused Conv1d(k=s=K) + flatten + ReLU + Linear(->1) + Sigmoid.

    x_ref  : (block_b, C*K)  batch tile of the flattened input (native dtype)
    w_ref  : (C*K, C*N)      block-diagonal conv weight, compute_dtype
    b1_ref : (1, C*N)        conv bias tiled in flatten-matching order, f32
    w2_ref : (1, C*N)        linear weight in PyTorch flatten order, f32
    b2_ref : (1,)            linear bias, f32 scalar in SMEM
    out_ref: (block_b, 1)    network output, f32
    """
    # Cast the MXU operand in-kernel (saves an XLA pre-pass over x in HBM).
    x = x_ref[...].astype(compute_dtype)
    # Single MXU push yields the lane-dense (block_b, C*N) conv slab in f32.
    act = jnp.dot(x, w_ref[...], preferred_element_type=jnp.float32)
    act = jnp.maximum(act + b1_ref[...], 0.0)                 # bias + ReLU (f32 VPU)
    # Linear(->1): elementwise mul by flatten-ordered weights + lane reduce.
    logits = jnp.sum(act * w2_ref[...], axis=1, keepdims=True) + b2_ref[0]
    if apply_sigmoid:                                         # task_type == 'BINARY'
        out_ref[...] = jax.nn.sigmoid(logits)
    else:                                                     # task_type == 'REG'
        out_ref[...] = logits


def pack_cnn_params(conv_w, conv_b, lin_w, lin_b, compute_dtype=jnp.bfloat16):
    """One-time packing of PyTorch-layout parameters into the kernel layout.

    conv_w: (N, 1, K), conv_b: (N,), lin_w: (1, N*C), lin_b: (1,)
    Returns (w_big (C*K, C*N), b1 (1, C*N), w2 (1, C*N), b2 (1,)).
    """
    N, in_ch, K = conv_w.shape
    assert in_ch == 1, "CNN expects a single input channel"
    CN = lin_w.shape[1]
    C = CN // N
    assert C * N == CN

    w1 = jnp.transpose(conv_w.reshape(N, K)).astype(jnp.float32)          # (K, N)
    # Block-diagonal conv weight: block (c, c) == w1, zeros elsewhere.
    w_big = jnp.kron(jnp.eye(C, dtype=jnp.float32), w1).astype(compute_dtype)
    # Conv bias tiled so b1[0, c*N + n] == conv_b[n].
    b1 = jnp.tile(conv_b.astype(jnp.float32).reshape(1, N), (1, C))        # (1, C*N)
    # PyTorch flatten order: flat[b, n*C + c] == conv[b, n, c]
    #   -> w2[0, c*N + n] == lin_w[0, n*C + c].
    w2 = jnp.transpose(lin_w.reshape(N, C)).reshape(1, C * N).astype(jnp.float32)
    b2 = lin_b.reshape(1).astype(jnp.float32)
    return w_big, b1, w2, b2


@functools.partial(jax.jit, static_argnames=("task_type", "block_b"))
def cnn_forward(x, w_big, b1, w2, b2, *, task_type="BINARY", block_b=None):
    """Jitted wrapper: flatten x (free reshape) and launch one pallas_call."""
    B = x.shape[0]
    L, CN = w_big.shape                              # (C*K, C*N)
    x2d = x.reshape(B, L)                            # contiguous -> free reshape

    if block_b is None:
        # One tile for small batches (block == full batch dim is always a
        # legal block shape); otherwise 512-row tiles, which amortize the
        # ~0.35 us/grid-step overhead and stay well inside scoped VMEM.
        block_b = B if B <= 512 else 512
    grid_b = pl.cdiv(B, block_b)
    b_pad = grid_b * block_b
    if b_pad != B:                                   # pad batch to a full tile
        x2d = jnp.pad(x2d, ((0, b_pad - B), (0, 0)))

    kernel = functools.partial(
        _cnn_kernel,
        apply_sigmoid=(task_type == "BINARY"),
        compute_dtype=w_big.dtype,
    )
    out = pl.pallas_call(
        kernel,
        out_shape=jax.ShapeDtypeStruct((b_pad, 1), jnp.float32),
        grid=(grid_b,),
        in_specs=[
            pl.BlockSpec((block_b, L), lambda i: (i, 0)),        # batch-tiled input
            pl.BlockSpec((L, CN), lambda i: (0, 0)),             # resident weights
            pl.BlockSpec((1, CN), lambda i: (0, 0)),             # tiled conv bias
            pl.BlockSpec((1, CN), lambda i: (0, 0)),             # linear weight row
            pl.BlockSpec(memory_space=pltpu.MemorySpace.SMEM),   # scalar linear bias
        ],
        out_specs=pl.BlockSpec((block_b, 1), lambda i: (i, 0)),
        compiler_params=pltpu.CompilerParams(
            dimension_semantics=("parallel",),   # megacore-shardable batch axis
        ),
    )(x2d, w_big, b1, w2, b2)
    return out[:B]


def cnn_reference(x, conv_w, conv_b, lin_w, lin_b, task_type="BINARY"):
    """Pure-JAX f32 reference matching PyTorch semantics."""
    B, _, L = x.shape
    N, _, K = conv_w.shape
    C = L // K
    patches = x.reshape(B, C, K)
    conv = jnp.einsum("bck,nk->bnc", patches, conv_w.reshape(N, K))
    conv = conv + conv_b[None, :, None]                # (B, N, C)
    flat = jnp.maximum(conv.reshape(B, N * C), 0.0)    # flatten(start_dim=1) + ReLU
    logits = flat @ lin_w.T + lin_b                    # (B, 1)
    if task_type == "BINARY":
        return jax.nn.sigmoid(logits)
    return logits


if __name__ == "__main__":
    # Small deterministic config: cfg.n_estimators_client=8, cfg.client_num=4,
    # n_channel=64, task_type='BINARY'.
    B = 16           # batch
    K = 8            # n_estimators_client (conv kernel size == stride)
    C = 4            # client_num (conv output length)
    N = 64           # n_channel
    L = K * C        # input sequence length

    key = jax.random.PRNGKey(0)
    k_x, k_cw, k_cb, k_lw, k_lb = jax.random.split(key, 5)

    x = jax.random.normal(k_x, (B, 1, L), dtype=jnp.float32)

    # Conv1d default-style init (uniform with bound 1/sqrt(in_ch*K)).
    conv_bound = 1.0 / jnp.sqrt(1.0 * K)
    conv_w = jax.random.uniform(k_cw, (N, 1, K), jnp.float32, -conv_bound, conv_bound)
    conv_b = jax.random.uniform(k_cb, (N,), jnp.float32, -conv_bound, conv_bound)

    # Linear: kaiming_uniform(fan_in, relu) -> bound = sqrt(6 / fan_in).
    fan_in = N * C
    lin_bound = jnp.sqrt(6.0 / fan_in)
    lin_w = jax.random.uniform(k_lw, (1, fan_in), jnp.float32, -lin_bound, lin_bound)
    lin_b = jax.random.uniform(k_lb, (1,), jnp.float32,
                               -1.0 / jnp.sqrt(fan_in), 1.0 / jnp.sqrt(fan_in))

    ref = cnn_reference(x, conv_w, conv_b, lin_w, lin_b, task_type="BINARY")

    # f32 MXU-operand path: must match the f32 reference tightly.
    params_f32 = pack_cnn_params(conv_w, conv_b, lin_w, lin_b,
                                 compute_dtype=jnp.float32)
    out_f32 = jax.block_until_ready(
        cnn_forward(x, *params_f32, task_type="BINARY", block_b=8))
    assert out_f32.shape == (B, 1)
    assert jnp.allclose(out_f32, ref, atol=1e-5, rtol=1e-5), (out_f32, ref)

    # bf16 MXU-operand path (performance default): in-kernel operand cast,
    # f32 accumulation + f32 epilogue keep the sigmoid output within a few
    # 1e-3 of the f32 reference.
    params_bf16 = pack_cnn_params(conv_w, conv_b, lin_w, lin_b,
                                  compute_dtype=jnp.bfloat16)
    out_bf16 = jax.block_until_ready(
        cnn_forward(x, *params_bf16, task_type="BINARY"))
    assert out_bf16.shape == (B, 1)
    assert jnp.allclose(out_bf16, ref, atol=5e-3, rtol=5e-2), (out_bf16, ref)

    print("KERNEL_OK")
</pallas_src>

<mosaic_0001>
module attributes {stable_mosaic.version = 11 : i64} {
  func.func @_cnn_kernel(%arg0: i32, %arg1: memref<8x32xf32, #tpu.memory_space<vmem>>, %arg2: memref<32x256xf32, #tpu.memory_space<vmem>>, %arg3: memref<1x256xf32, #tpu.memory_space<vmem>>, %arg4: memref<1x256xf32, #tpu.memory_space<vmem>>, %arg5: memref<1xf32, #tpu.memory_space<smem>>, %arg6: memref<8x1xf32, #tpu.memory_space<vmem>>) attributes {dimension_semantics = [#tpu.dimension_semantics<parallel>], iteration_bounds = array<i64: 2>, scalar_prefetch = 0 : i64, scratch_operands = 0 : i64, tpu.core_type = #tpu.core_type<tc>, window_params = [{transform_indices = @transform_0, window_bounds = array<i64: 8, 32>}, {pipeline_mode = #tpu.pipeline_mode<synchronous>, transform_indices = @transform_1, window_bounds = array<i64: 32, 256>}, {pipeline_mode = #tpu.pipeline_mode<synchronous>, transform_indices = @transform_2, window_bounds = array<i64: 1, 256>}, {pipeline_mode = #tpu.pipeline_mode<synchronous>, transform_indices = @transform_3, window_bounds = array<i64: 1, 256>}, {transform_indices = @transform_4, window_bounds = array<i64: 1>}, {transform_indices = @transform_5, window_bounds = array<i64: 8, 1>}]} {
    %c0 = arith.constant 0 : index
    %c0_0 = arith.constant 0 : index
    %0 = vector.load %arg1[%c0, %c0_0] : memref<8x32xf32, #tpu.memory_space<vmem>>, vector<8x32xf32>
    %c0_1 = arith.constant 0 : index
    %c0_2 = arith.constant 0 : index
    %1 = vector.load %arg2[%c0_1, %c0_2] : memref<32x256xf32, #tpu.memory_space<vmem>>, vector<32x256xf32>
    %cst = arith.constant dense<0.000000e+00> : vector<8x256xf32>
    %2 = tpu.matmul %0, %1, %cst {dimension_numbers = #tpu.dot_dimension_numbers<[1], [0], [0], [1], [0, 0, 1, 1], [], []>} : vector<8x32xf32>, vector<32x256xf32>, vector<8x256xf32> -> vector<8x256xf32>
    %c0_3 = arith.constant 0 : index
    %c0_4 = arith.constant 0 : index
    %3 = vector.load %arg3[%c0_3, %c0_4] : memref<1x256xf32, #tpu.memory_space<vmem>>, vector<1x256xf32>
    %4 = vector.broadcast %3 : vector<1x256xf32> to vector<8x256xf32>
    %5 = arith.addf %2, %4 : vector<8x256xf32>
    %cst_5 = arith.constant 0.000000e+00 : f32
    %6 = vector.broadcast %cst_5 : f32 to vector<8x256xf32>
    %7 = arith.maximumf %5, %6 : vector<8x256xf32>
    %c0_6 = arith.constant 0 : index
    %c0_7 = arith.constant 0 : index
    %8 = vector.load %arg4[%c0_6, %c0_7] : memref<1x256xf32, #tpu.memory_space<vmem>>, vector<1x256xf32>
    %9 = vector.broadcast %8 : vector<1x256xf32> to vector<8x256xf32>
    %10 = arith.mulf %7, %9 : vector<8x256xf32>
    %cst_8 = arith.constant dense<0.000000e+00> : vector<8xf32>
    %11 = vector.multi_reduction <add>, %10, %cst_8 [1] : vector<8x256xf32> to vector<8xf32>
    %12 = vector.shape_cast %11 : vector<8xf32> to vector<8x1xf32>
    %c0_9 = arith.constant 0 : index
    %13 = memref.load %arg5[%c0_9] : memref<1xf32, #tpu.memory_space<smem>>
    %14 = vector.broadcast %13 : f32 to vector<8x1xf32>
    %15 = arith.addf %12, %14 : vector<8x1xf32>
    %16 = arith.negf %15 : vector<8x1xf32>
    %17 = math.exp %16 : vector<8x1xf32>
    %cst_10 = arith.constant 1.000000e+00 : f32
    %18 = vector.broadcast %cst_10 : f32 to vector<8x1xf32>
    %19 = arith.addf %18, %17 : vector<8x1xf32>
    %20 = arith.divf %18, %19 : vector<8x1xf32>
    %c0_11 = arith.constant 0 : index
    %c0_12 = arith.constant 0 : index
    %21 = vector.load %arg6[%c0_11, %c0_12] : memref<8x1xf32, #tpu.memory_space<vmem>>, vector<8x1xf32>
    tpu.vector_store %arg6[%c0_11, %c0_12], %20 {strides = array<i32>} : memref<8x1xf32, #tpu.memory_space<vmem>>, vector<8x1xf32>,
    return
  }
  func.func @transform_0(%arg0: i32) -> (i32, i32) {
    %c0_i32 = arith.constant 0 : i32
    %c0_i32_0 = arith.constant 0 : i32
    return %arg0, %c0_i32 : i32, i32
  }
  func.func @transform_1(%arg0: i32) -> (i32, i32) {
    %c0_i32 = arith.constant 0 : i32
    %c0_i32_0 = arith.constant 0 : i32
    %c0_i32_1 = arith.constant 0 : i32
    return %c0_i32, %c0_i32_0 : i32, i32
  }
  func.func @transform_2(%arg0: i32) -> (i32, i32) {
    %c0_i32 = arith.constant 0 : i32
    %c0_i32_0 = arith.constant 0 : i32
    %c0_i32_1 = arith.constant 0 : i32
    return %c0_i32, %c0_i32_0 : i32, i32
  }
  func.func @transform_3(%arg0: i32) -> (i32, i32) {
    %c0_i32 = arith.constant 0 : i32
    %c0_i32_0 = arith.constant 0 : i32
    %c0_i32_1 = arith.constant 0 : i32
    return %c0_i32, %c0_i32_0 : i32, i32
  }
  func.func @transform_4(%arg0: i32) -> i32 {
    %c0_i32 = arith.constant 0 : i32
    %c0_i32_0 = arith.constant 0 : i32
    return %c0_i32 : i32
  }
  func.func @transform_5(%arg0: i32) -> (i32, i32) {
    %c0_i32 = arith.constant 0 : i32
    %c0_i32_0 = arith.constant 0 : i32
    return %arg0, %c0_i32 : i32, i32
  }
}

</mosaic_0001>

<llo_original>
// kernel: cnn_forward.1
$region0: #{cnn_forward.1}
  #allocation0 [shape = 'u32[]', space=smem, size = 0x4, offset = 0x4, fixed_abs, tag = 'smem constant byte address 0x4 - core index']
  #allocation1 [shape = 'u32[144,128]{1,0:T(1,128)}', space=vmem, size = 0x12000, scoped, tag = 'internal scratch']
  #allocation2 [shape = 'f32[1]{0:T(128)S(6)}', space=smem, size = 0x200, scoped, tag = 'scoped memory for cnn_forward.1']
  %s0 = inlined_call_operand.hbm [shape: f32[16,32], index: 0, kind: input, shape index: {}]
  %s1 = inlined_call_operand.hbm [shape: f32[32,256], index: 1, kind: input, shape index: {}]
  %s2 = inlined_call_operand.vmem [shape: f32[1,256], index: 2, kind: input, shape index: {}]
  %s3 = inlined_call_operand.vmem [shape: f32[1,256], index: 3, kind: input, shape index: {}]
  %s4 = inlined_call_operand.<no memory space> [shape: f32[1], index: 4, kind: input, shape index: {}]
  %s5 = inlined_call_operand.vmem [shape: f32[16,1], index: 5, kind: output, shape index: {}]
  %s6 = sld [smem:[#allocation0]]
  $region61: #{cnn_forward.1} parent=0
    _
  %s8 = ssub.s32 1, %s6
  %s9 = scalar_select 0, %s8, %s6
  %10 = sst [smem:[#allocation2]] %s4
  $region1: #{cnn_forward.1} parent=0
    #allocation3 [shape = 'u8[8192]{0}', space=vmem, size = 0x2000, scoped, tag = 'input window, operand 0']
    #allocation4 [shape = 's32[2]{0}', space=sflag, size = 0x8, scoped, tag = 'scoped memory for cnn_forward.1']
    #allocation5 [shape = 'u8[32768]{0}', space=vmem, size = 0x8000, scoped, tag = 'input window, operand 1, single buffered']
    #allocation6 [shape = 's32[1]{0}', space=sflag, size = 0x4, scoped, tag = 'scoped memory for cnn_forward.1']
    %11 = vsyncpa [#allocation4], 0
    %s12 = scalar_lea.sflag [#allocation4], 1
    %13 = vsyncpa %s12, 0
    %14 = vsyncpa [#allocation6], 0
    loop: start=0, step=1, limit=4
    $region2: #{cnn_forward.1} parent=1 // loop_pre_header
      _
    $region3: #{cnn_forward.1} parent=1 // loop_header
      %s16 = sphi 0, %s20
      %p17 = scmp.ge.s32.totalorder %s16, 4
      %s26 = sphi 0, %s28
      %s29 = sphi 0, %s26
      %s30 = sphi 0, %s29
      %s46 = sphi 0, %s30
      %s50 = sphi 0, %s50
      %s52 = sphi 0, %s50
      %s53 = sphi 0, %s52
      %s67 = sphi 0, %s53
      %s71 = sphi 0, %s71
      %s73 = sphi 0, %s71
      %s74 = sphi 0, %s73
      %s88 = sphi 0, %s74
      %s92 = sphi 0, %s92
      %s94 = sphi 0, %s92
      %s95 = sphi 0, %s94
      %s109 = sphi 0, %s95
      %s113 = sphi 0, %s113
      %s115 = sphi 0, %s113
      %s116 = sphi 0, %s115
      %s130 = sphi 0, %s116
      %s136 = sphi 0, %s138
      %s139 = sphi 0, %s136
      %s140 = sphi 0, %s139
      %s156 = sphi 0, %s140
    $region4: #{cnn_forward.1} parent=1 // loop_header_branch
      %19 = sbr.rel (%p17) target = $region8
    $region5: #{cnn_forward.1} parent=1 // loop_body
      %s21 = ssub.s32 %s16, 1
      %s22 = ssub.s32 %s16, 2
      %s23 = sadd.s32 %s16, 1
      %s24 = ssub.s32 %s16, %s23
      %p25 = scmp.eq.s32.totalorder %s24, 0
      %s27 = sadd.s32 %s26, 1
      %s28 = scalar_select %p25, %s26, %s27
      %p31 = pneg %p25
      %p32 = scmp.eq.s32.totalorder %s16, 1
      %p33 = por %p31, %p32
      %p34 = scmp.ne.s32.totalorder %s26, %s29
      %p35 = scmp.eq.s32.totalorder %s16, 0
      %p36 = por %p34, %p35
      %p37 = scmp.ne.s32.totalorder %s26, %s29
      %p38 = scmp.eq.s32.totalorder %s21, 1
      %p39 = por %p37, %p38
      %p40 = scmp.ne.s32.totalorder %s29, %s30
      %p41 = scmp.eq.s32.totalorder %s21, 0
      %p42 = por %p40, %p41
      %p43 = scmp.ne.s32.totalorder %s29, %s30
      %p44 = scmp.eq.s32.totalorder %s22, 1
      %p45 = por %p43, %p44
      %p47 = scmp.ne.s32.totalorder %s30, %s46
      %p48 = scmp.eq.s32.totalorder %s22, 0
      %p49 = por %p47, %p48
      %s51 = sadd.s32 %s50, 1
      %p54 = scmp.eq.s32.totalorder %s16, 1
      %p55 = scmp.ne.s32.totalorder %s50, %s52
      %p56 = scmp.eq.s32.totalorder %s16, 0
      %p57 = por %p55, %p56
      %p58 = scmp.ne.s32.totalorder %s50, %s52
      %p59 = scmp.eq.s32.totalorder %s21, 1
      %p60 = por %p58, %p59
      %p61 = scmp.ne.s32.totalorder %s52, %s53
      %p62 = scmp.eq.s32.totalorder %s21, 0
      %p63 = por %p61, %p62
      %p64 = scmp.ne.s32.totalorder %s52, %s53
      %p65 = scmp.eq.s32.totalorder %s22, 1
      %p66 = por %p64, %p65
      %p68 = scmp.ne.s32.totalorder %s53, %s67
      %p69 = scmp.eq.s32.totalorder %s22, 0
      %p70 = por %p68, %p69
      %s72 = sadd.s32 %s71, 1
      %p75 = scmp.eq.s32.totalorder %s16, 1
      %p76 = scmp.ne.s32.totalorder %s71, %s73
      %p77 = scmp.eq.s32.totalorder %s16, 0
      %p78 = por %p76, %p77
      %p79 = scmp.ne.s32.totalorder %s71, %s73
      %p80 = scmp.eq.s32.totalorder %s21, 1
      %p81 = por %p79, %p80
      %p82 = scmp.ne.s32.totalorder %s73, %s74
      %p83 = scmp.eq.s32.totalorder %s21, 0
      %p84 = por %p82, %p83
      %p85 = scmp.ne.s32.totalorder %s73, %s74
      %p86 = scmp.eq.s32.totalorder %s22, 1
      %p87 = por %p85, %p86
      %p89 = scmp.ne.s32.totalorder %s74, %s88
      %p90 = scmp.eq.s32.totalorder %s22, 0
      %p91 = por %p89, %p90
      %s93 = sadd.s32 %s92, 1
      %p96 = scmp.eq.s32.totalorder %s16, 1
      %p97 = scmp.ne.s32.totalorder %s92, %s94
      %p98 = scmp.eq.s32.totalorder %s16, 0
      %p99 = por %p97, %p98
      %p100 = scmp.ne.s32.totalorder %s92, %s94
      %p101 = scmp.eq.s32.totalorder %s21, 1
      %p102 = por %p100, %p101
      %p103 = scmp.ne.s32.totalorder %s94, %s95
      %p104 = scmp.eq.s32.totalorder %s21, 0
      %p105 = por %p103, %p104
      %p106 = scmp.ne.s32.totalorder %s94, %s95
      %p107 = scmp.eq.s32.totalorder %s22, 1
      %p108 = por %p106, %p107
      %p110 = scmp.ne.s32.totalorder %s95, %s109
      %p111 = scmp.eq.s32.totalorder %s22, 0
      %p112 = por %p110, %p111
      %s114 = sadd.s32 %s113, 1
      %p117 = scmp.eq.s32.totalorder %s16, 1
      %p118 = scmp.ne.s32.totalorder %s113, %s115
      %p119 = scmp.eq.s32.totalorder %s16, 0
      %p120 = por %p118, %p119
      %p121 = scmp.ne.s32.totalorder %s113, %s115
      %p122 = scmp.eq.s32.totalorder %s21, 1
      %p123 = por %p121, %p122
      %p124 = scmp.ne.s32.totalorder %s115, %s116
      %p125 = scmp.eq.s32.totalorder %s21, 0
      %p126 = por %p124, %p125
      %p127 = scmp.ne.s32.totalorder %s115, %s116
      %p128 = scmp.eq.s32.totalorder %s22, 1
      %p129 = por %p127, %p128
      %p131 = scmp.ne.s32.totalorder %s116, %s130
      %p132 = scmp.eq.s32.totalorder %s22, 0
      %p133 = por %p131, %p132
      %s134 = ssub.s32 %s16, %s23
      %p135 = scmp.eq.s32.totalorder %s134, 0
      %s137 = sadd.s32 %s136, 1
      %s138 = scalar_select %p135, %s136, %s137
      %p141 = pneg %p135
      %p142 = scmp.eq.s32.totalorder %s16, 1
      %p143 = por %p141, %p142
      %p144 = scmp.ne.s32.totalorder %s136, %s139
      %p145 = scmp.eq.s32.totalorder %s16, 0
      %p146 = por %p144, %p145
      %p147 = scmp.ne.s32.totalorder %s136, %s139
      %p148 = scmp.eq.s32.totalorder %s21, 1
      %p149 = por %p147, %p148
      %p150 = scmp.ne.s32.totalorder %s139, %s140
      %p151 = scmp.eq.s32.totalorder %s21, 0
      %p152 = por %p150, %p151
      %p153 = scmp.ne.s32.totalorder %s139, %s140
      %p154 = scmp.eq.s32.totalorder %s22, 1
      %p155 = por %p153, %p154
      %p157 = scmp.ne.s32.totalorder %s140, %s156
      %p158 = scmp.eq.s32.totalorder %s22, 0
      %p159 = por %p157, %p158
      %p160 = scmp.le.s32.totalorder 1, %s16
      %p161 = scmp.lt.s32.totalorder %s16, 3
      %p162 = pnand %p160, %p161
      %p163 = pneg %p162
      // Predicated region
      $region9: #{cnn_forward.1} parent=5 // pred_check
        _
      $region10: #{cnn_forward.1} parent=5 // pred_check_branch
        %165 = sbr.rel (%p162) target = $region12
      $region11: #{cnn_forward.1} parent=5 // pred_region
        %s166 = ssub.s32 %s16, 1
        // Predicated region
        $region13: #{cnn_forward.1} parent=11 // pred_check
          %p167 = pneg %p63
        $region14: #{cnn_forward.1} parent=11 // pred_check_branch
          %169 = sbr.rel (%p167) target = $region16
        $region15: #{cnn_forward.1} parent=11 // pred_region
          %s171 = ssub.s32 1024, 1024
          %172 = vsyncadd [#allocation6], %s171
          %s173 = sshll.u32 [#allocation5], 4
          %s174 = int_to_ptr.vmem [resolvable:$true] %s173
          %179 = dma.hbm_to_vmem [thread:$0]  %s1, 1024, %s174, [#allocation6], 256, 256, 16
        $region16: #{cnn_forward.1} parent=11 // pred_fallthru
          _
        // Predicated region
        $region17: #{cnn_forward.1} parent=11 // pred_check
          %p180 = pneg %p84
        $region18: #{cnn_forward.1} parent=11 // pred_check_branch
          %182 = sbr.rel (%p180) target = $region20
        $region19: #{cnn_forward.1} parent=11 // pred_region
          _
        $region20: #{cnn_forward.1} parent=11 // pred_fallthru
          _
        // Predicated region
        $region21: #{cnn_forward.1} parent=11 // pred_check
          %p183 = pneg %p105
        $region22: #{cnn_forward.1} parent=11 // pred_check_branch
          %185 = sbr.rel (%p183) target = $region24
        $region23: #{cnn_forward.1} parent=11 // pred_region
          _
        $region24: #{cnn_forward.1} parent=11 // pred_fallthru
          _
        // Predicated region
        $region25: #{cnn_forward.1} parent=11 // pred_check
          %p186 = pneg %p126
        $region26: #{cnn_forward.1} parent=11 // pred_check_branch
          %188 = sbr.rel (%p186) target = $region28
        $region27: #{cnn_forward.1} parent=11 // pred_region
          _
        $region28: #{cnn_forward.1} parent=11 // pred_fallthru
          _
      $region12: #{cnn_forward.1} parent=5 // pred_fallthru
        _
      %p189 = scmp.lt.s32.totalorder %s16, 2
      // Predicated region
      $region29: #{cnn_forward.1} parent=5 // pred_check
        %p190 = pneg %p189
      $region30: #{cnn_forward.1} parent=5 // pred_check_branch
        %192 = sbr.rel (%p190) target = $region32
      $region31: #{cnn_forward.1} parent=5 // pred_region
        // Predicated region
        $region33: #{cnn_forward.1} parent=31 // pred_check
          %p193 = pneg %p36
        $region34: #{cnn_forward.1} parent=31 // pred_check_branch
          %195 = sbr.rel (%p193) target = $region36
        $region35: #{cnn_forward.1} parent=31 // pred_region
          %s196 = sand.u32 %s26, 1
          %s197 = scalar_lea.sflag [#allocation4], %s196
          %s198 = sand.u32 %s26, 1
          %s199 = smul.addr %s198, 8
          %s200 = scalar_lea.vmem [#allocation3], %s199
          %s202 = ssub.s32 128, 128
          %203 = vsyncadd %s197, %s202
          %s204 = smul.addr %s16, 128
          %s205 = scalar_lea.hbm %s0, %s204
          %s207 = sshll.u32 %s200, 4
          %s208 = int_to_ptr.vmem [resolvable:$true] %s207
          %210 = dma.hbm_to_vmem [thread:$0]  %s205, 128, %s208, %s197
        $region36: #{cnn_forward.1} parent=31 // pred_fallthru
          _
      $region32: #{cnn_forward.1} parent=5 // pred_fallthru
        _
      %p211 = scmp.le.s32.totalorder 1, %s16
      %p212 = scmp.lt.s32.totalorder %s16, 3
      %p213 = pnand %p211, %p212
      %p214 = pneg %p213
      // Predicated region
      $region37: #{cnn_forward.1} parent=5 // pred_check
        _
      $region38: #{cnn_forward.1} parent=5 // pred_check_branch
        %216 = sbr.rel (%p213) target = $region40
      $region39: #{cnn_forward.1} parent=5 // pred_region
        %s217 = ssub.s32 %s16, 1
        %s218 = sand.u32 %s29, 1
        %s219 = scalar_lea.sflag [#allocation4], %s218
        %s220 = sand.u32 %s29, 1
        %s221 = smul.addr %s220, 8
        %s222 = scalar_lea.vmem [#allocation3], %s221
        // Predicated region
        $region41: #{cnn_forward.1} parent=39 // pred_check
          %p223 = pneg %p42
        $region42: #{cnn_forward.1} parent=39 // pred_check_branch
          %225 = sbr.rel (%p223) target = $region44
        $region43: #{cnn_forward.1} parent=39 // pred_region
          %226 = dma.done %s219, 128
        $region44: #{cnn_forward.1} parent=39 // pred_fallthru
          _
        // Predicated region
        $region45: #{cnn_forward.1} parent=39 // pred_check
          %p227 = pneg %p63
        $region46: #{cnn_forward.1} parent=39 // pred_check_branch
          %229 = sbr.rel (%p227) target = $region48
        $region47: #{cnn_forward.1} parent=39 // pred_region
          %230 = dma.done [#allocation6], 1024
        $region48: #{cnn_forward.1} parent=39 // pred_fallthru
          _
        %s231 = sand.u32 %s29, 1
        %s232 = scalar_lea.sflag [#allocation4], %s231
        %s233 = sand.u32 %s29, 1
        %s234 = smul.addr %s233, 8
        %s235 = scalar_lea.vmem [#allocation3], %s234
        %p236 = pneg %p42
        %p237 = pneg %p39
        %p238 = pneg %p63
        %p239 = pneg %p60
        %p240 = pneg %p84
        %p241 = pneg %p81
        %p242 = pneg %p105
        %p243 = pneg %p102
        %p244 = pneg %p126
        %p245 = pneg %p123
        %p246 = pneg %p152
        %p247 = pneg %p149
        %p248 = scmp.lt.s32.totalorder %s21, 1
        %s249 = scalar_select %p248, %s21, 1
        %s250 = smul.addr %s249, 8
        %s251 = scalar_lea.vmem %s5, %s250
        %p252 = scmp.lt.s32.totalorder %s21, 1
        %s253 = scalar_select %p252, %s21, 1
        %s254 = smul.addr %s253, 8
        %s255 = scalar_lea.vmem %s5, %s254
        %v256 = vld [vmem:[%s222] sm:$0xff]
        %v257 = vld [vmem:[#allocation5] sm:$0xff]
        %v258 = vld [vmem:[#allocation5 + $0x8] sm:$0xff]
        %v259 = vld [vmem:[#allocation5 + $0x10] sm:$0xff]
        %v260 = vld [vmem:[#allocation5 + $0x18] sm:$0xff]
        %v261 = vld [vmem:[#allocation5 + $0x20] sm:$0xff]
        %v262 = vld [vmem:[#allocation5 + $0x28] sm:$0xff]
        %v263 = vld [vmem:[#allocation5 + $0x30] sm:$0xff]
        %v264 = vld [vmem:[#allocation5 + $0x38] sm:$0xff]
        %v265 = vld [vmem:[%s2] sm:$0x3]
        %v267 = vlaneseq
        %v268 = vshrl.u32 %v267, 7
        %v269 = vsub.s32 0, %v268
        %v270 = vrot.slane %v265, %v269
        %v271 = vlaneseq
        %v272 = vshrl.u32 %v271, 7
        %v273 = vsub.s32 1, %v272
        %v274 = vrot.slane %v265, %v273
        %vm277 = vcmask 261120
        %v279 = vsel %vm277, %v256, 0
        %281 = vmatprep.subr.mxu0 %v258
        %282 = vmatpush1.msra.mxu0 %v257
        %283 = vmatprep.subr.mxu0 %v260
        %284 = vmatpush1.msra.mxu0 %v259
        %285 = vmatprep.subr.mxu0 %v262
        %286 = vmatpush1.msra.mxu0 %v261
        %287 = vmatprep.subr.mxu0 %v264
        %288 = vmatpush1.msra.mxu0 %v263
        %289 = vmatprep.subr.mxu0 0.0
        %290 = vmatpush1.msra.mxu0 0.0
        %291 = vmatprep.subr.mxu0 0.0
        %292 = vmatpush1.msra.mxu0 0.0
        %293 = vmatprep.subr.mxu0 0.0
        %294 = vmatpush1.msra.mxu0 0.0
        %295 = vmatprep.subr.mxu0 0.0
        %296 = vmatpush1.msra.mxu0 0.0
        %297 = vmatprep.subr.mxu0 0.0
        %298 = vmatpush1.msra.mxu0 0.0
        %299 = vmatprep.subr.mxu0 0.0
        %300 = vmatpush1.msra.mxu0 0.0
        %301 = vmatprep.subr.mxu0 0.0
        %302 = vmatpush1.msra.mxu0 0.0
        %303 = vmatprep.subr.mxu0 0.0
        %304 = vmatpush1.msra.mxu0 0.0
        %305 = vmatprep.subr.mxu0 0.0
        %306 = vmatpush1.msra.mxu0 0.0
        %307 = vmatprep.subr.mxu0 0.0
        %308 = vmatpush1.msra.mxu0 0.0
        %309 = vmatprep.subr.mxu0 0.0
        %310 = vmatpush1.msra.mxu0 0.0
        %311 = vmatprep.subr.mxu0 0.0
        %312 = vmatpush1.msra.mxu0 0.0
        %313 = vmatprep.subr.mxu0 0.0
        %314 = vmatpush1.msra.mxu0 0.0
        %315 = vmatprep.subr.mxu0 0.0
        %316 = vmatpush1.msra.mxu0 0.0
        %317 = vmatprep.subr.mxu0 0.0
        %318 = vmatpush1.msra.mxu0 0.0
        %319 = vmatprep.subr.mxu0 0.0
        %320 = vmatpush1.msra.mxu0 0.0
        %321 = vmatprep.subr.mxu0 0.0
        %322 = vmatpush1.msra.mxu0 0.0
        %323 = vmatprep.subr.mxu0 0.0
        %324 = vmatpush1.msra.mxu0 0.0
        %325 = vmatprep.subr.mxu0 0.0
        %326 = vmatpush1.msra.mxu0 0.0
        %327 = vmatprep.subr.mxu0 0.0
        %328 = vmatpush1.msra.mxu0 0.0
        %329 = vmatprep.subr.mxu0 0.0
        %330 = vmatpush1.msra.mxu0 0.0
        %331 = vmatprep.subr.mxu0 0.0
        %332 = vmatpush1.msra.mxu0 0.0
        %333 = vmatprep.subr.mxu0 0.0
        %334 = vmatpush1.msra.mxu0 0.0
        %335 = vmatprep.subr.mxu0 0.0
        %336 = vmatpush1.msra.mxu0 0.0
        %337 = vmatprep.subr.mxu0 0.0
        %338 = vmatpush1.msra.mxu0 0.0
        %339 = vmatprep.subr.mxu0 0.0
        %340 = vmatpush1.msra.mxu0 0.0
        %341 = vmatprep.subr.mxu0 0.0
        %342 = vmatpush1.msra.mxu0 0.0
        %343 = vmatprep.subr.mxu0 0.0
        %344 = vmatpush1.msra.mxu0 0.0
        %345 = vmatprep.mubr.f32.mxu0 0.0
        %346 = vmatmul.mubr.f32.gmra.mrb[0].mxu0 %v279
        %v347 = vpop.f32.mrb[0].mxu0
        %v348 = vadd.f32 %v270, %v347
        %v349 = vpop.f32.mrb[0].mxu0
        %v350 = vadd.f32 %v274, %v349
        %351 = vdwg.mxu0
        %v352 = vmax.f32 %v348, 0.0
        %v353 = vmax.f32 %v350, 0.0
        %v354 = vld [vmem:[%s3] sm:$0x3]
        %v356 = vlaneseq
        %v357 = vshrl.u32 %v356, 7
        %v358 = vsub.s32 0, %v357
        %v359 = vrot.slane %v354, %v358
        %v360 = vlaneseq
        %v361 = vshrl.u32 %v360, 7
        %v362 = vsub.s32 1, %v361
        %v363 = vrot.slane %v354, %v362
        %v366 = vmul.f32 %v352, %v359
        %v367 = vmul.f32 %v353, %v363
        %v368 = vadd.f32 %v366, %v367
        %369 = vadd.xlane.f32.xlu0 %v368
        %v370 = vpop.xlane.xlu0 %369
        %s371 = sld [smem:[#allocation2]]
        %v372 = vstv %s371
        %v373 = vadd.f32 %v370, %v372
        %v374 = vxor.u32 %v373, 2147483648
        %v375 = vmul.f32 %v374, 1.442695
        %v376 = vpow.pop %v375
        %v377 = vadd.f32 %v376, 1.0
        %v378 = vrcp.pop %v377
        %v379 = vmul.f32 1.0, %v378
        %vm380 = vcmask 7168
        %381 = vst.msk [vmem:[%s255] sm:$0xff] %vm380, %v379
        %p382 = scmp.lt.s32.totalorder %s21, 1
        %s383 = scalar_select %p382, %s21, 1
        %s384 = smul.addr %s383, 8
        %s385 = scalar_lea.vmem %s5, %s384
        // Predicated region
        $region49: #{cnn_forward.1} parent=39 // pred_check
          %p386 = pneg %p149
        $region50: #{cnn_forward.1} parent=39 // pred_check_branch
          %388 = sbr.rel (%p386) target = $region52
        $region51: #{cnn_forward.1} parent=39 // pred_region
          _
        $region52: #{cnn_forward.1} parent=39 // pred_fallthru
          _
      $region40: #{cnn_forward.1} parent=5 // pred_fallthru
        _
      %p389 = scmp.le.s32.totalorder 2, %s16
      // Predicated region
      $region53: #{cnn_forward.1} parent=5 // pred_check
        %p390 = pneg %p389
      $region54: #{cnn_forward.1} parent=5 // pred_check_branch
        %392 = sbr.rel (%p390) target = $region56
      $region55: #{cnn_forward.1} parent=5 // pred_region
        %s393 = ssub.s32 %s16, 2
        // Predicated region
        $region57: #{cnn_forward.1} parent=55 // pred_check
          %p394 = pneg %p155
        $region58: #{cnn_forward.1} parent=55 // pred_check_branch
          %396 = sbr.rel (%p394) target = $region60
        $region59: #{cnn_forward.1} parent=55 // pred_region
          %p397 = scmp.lt.s32.totalorder %s22, 1
          %s398 = scalar_select %p397, %s22, 1
          %s399 = smul.addr %s398, 8
          %s400 = scalar_lea.vmem %s5, %s399
        $region60: #{cnn_forward.1} parent=55 // pred_fallthru
          _
      $region56: #{cnn_forward.1} parent=5 // pred_fallthru
        _
    $region6: #{cnn_forward.1} parent=1 // loop_footer
      %s20 = sadd.s32 1, %s16
    $region7: #{cnn_forward.1} parent=1 // loop_footer_branch
      %15 = sbr.rel target = $region3
    $region8: #{cnn_forward.1} parent=1 // loop_exit
      _
    %401 = vsyncpa [#allocation4], 1
    %s402 = scalar_lea.sflag [#allocation4], 1
    %403 = vsyncpa %s402, 1
    %404 = vsyncpa [#allocation6], 1

</llo_original>
